<compile_context>
chip_gen: v5e
topology: v5e:2x2
jax: 0.10.0
libtpu: 0.0.40
codegen_flags: <defaults>
</compile_context>

<pallas_src>
import functools
import math

import jax
import jax.numpy as jnp
from jax import lax
from jax.experimental import pallas as pl
from jax.experimental.pallas import tpu as pltpu


# ------------------------------- tiling helpers ------------------------------ #

def _round_up(x, m):
    return ((x + m - 1) // m) * m


def _pick_tile(dim, pref, quantum):
    """Largest multiple of `quantum` dividing `dim`, <= pref; full dim if dim <= pref.

    Callers that need a guaranteed bounded tile pad `dim` to a multiple of `quantum`
    first (pallas_linear does), so a divisor <= pref always exists.
    """
    if dim <= pref:
        return dim
    t = (pref // quantum) * quantum
    while t >= quantum:
        if dim % t == 0:
            return t
        t -= quantum
    return dim  # un-padded caller with no clean divisor: full-extent block (always legal)


# ------------------------------ tiled linear (GEMM) -------------------------- #

def _linear_kernel(x_ref, w_ref, b_ref, o_ref, acc_ref):
    # x tile: (tm, tk); w tile (torch layout): (tn, tk); b tile: (1, tn)
    @pl.when(pl.program_id(2) == 0)
    def _():
        acc_ref[...] = jnp.zeros_like(acc_ref)

    # Contract x dim 1 with w dim 1 -> (tm, tn); no explicit weight transpose (MXU direct).
    acc_ref[...] += lax.dot_general(
        x_ref[...], w_ref[...],
        (((1,), (1,)), ((), ())),
        preferred_element_type=jnp.float32,
    )

    @pl.when(pl.program_id(2) == pl.num_programs(2) - 1)
    def _():
        o_ref[...] = (acc_ref[...] + b_ref[...]).astype(o_ref.dtype)


def pallas_linear(x, w, b, *, compute_dtype=jnp.float32,
                  tm_pref=512, tn_pref=256, tk_pref=512):
    """y = x @ w.T + b with torch-layout weight w of shape (Dout, Din).

    Inputs are cast to `compute_dtype` (bf16 recommended on v5e/v6e/v7x MXUs),
    accumulation and output stay f32.
    """
    M, Din = x.shape
    Dout = w.shape[0]
    qm = 8 if compute_dtype == jnp.float32 else 16  # sublane quantum (f32 / bf16)

    # Pad every dim to its tiling quantum: tiles always divide cleanly, stores stay
    # unmasked, and VMEM is bounded by the tile prefs (no silent full-extent fallback).
    Mp, Kp, Np = _round_up(M, qm), _round_up(Din, 128), _round_up(Dout, 128)
    xp = x.astype(compute_dtype)
    wp = w.astype(compute_dtype)
    bp = b.astype(jnp.float32)
    if (Mp, Kp) != (M, Din):
        xp = jnp.pad(xp, ((0, Mp - M), (0, Kp - Din)))
    if (Np, Kp) != (Dout, Din):
        wp = jnp.pad(wp, ((0, Np - Dout), (0, Kp - Din)))
    if Np != Dout:
        bp = jnp.pad(bp, (0, Np - Dout))

    tm = _pick_tile(Mp, tm_pref, qm)
    tn = _pick_tile(Np, tn_pref, 128)   # lane-aligned N tile -> unmasked vst
    tk = _pick_tile(Kp, tk_pref, 128)   # lane-aligned K tile
    grid = (Mp // tm, Np // tn, Kp // tk)

    # Explicit VMEM budget: 2x double-buffered input tiles + acc + double-buffered out + bias.
    isz = jnp.dtype(compute_dtype).itemsize
    vmem_need = (2 * tm * tk * isz + 2 * tn * tk * isz
                 + 3 * tm * tn * 4 + 2 * tn * 4)
    vmem_limit = int(min(max(2 * vmem_need, 16 * 2**20), 48 * 2**20))

    out = pl.pallas_call(
        _linear_kernel,
        out_shape=jax.ShapeDtypeStruct((Mp, Np), jnp.float32),
        grid_spec=pltpu.PrefetchScalarGridSpec(
            num_scalar_prefetch=0,
            grid=grid,
            in_specs=[
                pl.BlockSpec((tm, tk), lambda i, j, kk: (i, kk)),
                pl.BlockSpec((tn, tk), lambda i, j, kk: (j, kk)),
                pl.BlockSpec((1, tn), lambda i, j, kk: (0, j)),
            ],
            out_specs=pl.BlockSpec((tm, tn), lambda i, j, kk: (i, j)),
            scratch_shapes=[pltpu.VMEM((tm, tn), jnp.float32)],
        ),
        compiler_params=pltpu.CompilerParams(
            dimension_semantics=("parallel", "parallel", "arbitrary"),
            vmem_limit_bytes=vmem_limit),
    )(xp, wp, bp.reshape(1, Np))
    return out[:M, :Dout]


# ------------------------------ attention kernel ------------------------------ #

def _attn_kernel(coef_ref, q_ref, k_ref, v_ref, pos_ref, bias_ref,
                 out_ref, att_ref, *, ln_inv, lo, hi):
    # One grid step = one (batch, head, query-tile).
    h = pl.program_id(1)
    coef = coef_ref[h]                  # softplus(gamma_h), scalar from SMEM
    q = q_ref[0, 0]                     # (tq, d_k)  (bf16 or f32)
    k = k_ref[0, 0]                     # (S,  d_k)
    v = v_ref[0, 0]                     # (S,  d_k)

    # Raw scores (no scale yet): MXU matmul, f32 accumulation, no explicit transpose.
    raw = lax.dot_general(q, k, (((1,), (1,)), ((), ())),
                          preferred_element_type=jnp.float32)          # (tq, S)

    # Positional decay rebuilt in-kernel with 1/sqrt(d_k) folded in:
    #   clip(exp(pos*coef), 1e-5, 1e5) / sqrt(d_k)
    # = clip(exp(pos*coef + ln(1/sqrt(d_k))), 1e-5/sqrt(d_k), 1e5/sqrt(d_k))
    decay = jnp.clip(jnp.exp(pos_ref[...] * coef + ln_inv), lo, hi)    # EUP exp

    s = raw * decay + bias_ref[...]     # single multiply-add; bias = -1e32 on masked

    # Numerically stable softmax over the key axis (f32 throughout).
    m = jnp.max(s, axis=-1, keepdims=True)
    e = jnp.exp(s - m)
    denom = jnp.sum(e, axis=-1, keepdims=True)
    p = e * pl.reciprocal(denom, approx=False)   # one reciprocal/row + broadcast mul
    # TODO(synk): nn.Dropout is identity at inference; training-mode dropout not implemented.

    att_ref[0, 0] = p
    out_ref[0, 0] = jnp.dot(p.astype(v.dtype), v,
                            preferred_element_type=jnp.float32).astype(out_ref.dtype)


def pallas_attention(qp, kp, vp, pos, bias, pos_coef, d_k, *, tq_pref=256):
    """qp/kp/vp: (bs, h, S, d_k). Returns (out (bs,h,S,d_k) f32, att (bs,h,S,S) f32)."""
    bs, n_heads, S, _ = qp.shape
    cq = 8 if qp.dtype == jnp.float32 else 16
    tq = _pick_tile(S, tq_pref, cq)     # query-tile so the (tq,S) slab stays VMEM-friendly
    n_q = S // tq

    ln_inv = -0.5 * math.log(d_k)
    inv = 1.0 / math.sqrt(d_k)
    kernel = functools.partial(_attn_kernel, ln_inv=ln_inv, lo=1e-5 * inv, hi=1e5 * inv)

    out, att = pl.pallas_call(
        kernel,
        out_shape=(
            jax.ShapeDtypeStruct((bs, n_heads, S, d_k), jnp.float32),
            jax.ShapeDtypeStruct((bs, n_heads, S, S), jnp.float32),
        ),
        grid=(bs, n_heads, n_q),
        in_specs=[
            # per-head gamma coefficients live in SMEM (scalar reads, no HBM (h,S,S) tensor)
            pl.BlockSpec(memory_space=pltpu.MemorySpace.SMEM),
            pl.BlockSpec((1, 1, tq, d_k), lambda b, h, qi: (b, h, qi, 0)),
            pl.BlockSpec((1, 1, S, d_k), lambda b, h, qi: (b, h, 0, 0)),
            pl.BlockSpec((1, 1, S, d_k), lambda b, h, qi: (b, h, 0, 0)),
            pl.BlockSpec((tq, S), lambda b, h, qi: (qi, 0)),   # |i-j|/21 (shared)
            pl.BlockSpec((tq, S), lambda b, h, qi: (qi, 0)),   # additive mask bias (shared)
        ],
        out_specs=(
            pl.BlockSpec((1, 1, tq, d_k), lambda b, h, qi: (b, h, qi, 0)),
            pl.BlockSpec((1, 1, tq, S), lambda b, h, qi: (b, h, qi, 0)),
        ),
        compiler_params=pltpu.CompilerParams(
            dimension_semantics=("parallel", "parallel", "parallel")),
    )(pos_coef, qp, kp, vp, pos, bias)
    return out, att


# ------------------------------ module wrapper -------------------------------- #

def multi_head_attention(q, k, v, mask, params, n_heads, d_k, *,
                         compute_dtype=jnp.float32):
    bs, S, d_model = q.shape

    # Fused q+k projection: both use k_linear (as in source), so stack into one GEMM.
    qk = jnp.concatenate(
        [q.reshape(bs * S, d_model), k.reshape(bs * S, d_model)], axis=0)
    qk_proj = pallas_linear(qk, params["k_linear_w"], params["k_linear_b"],
                            compute_dtype=compute_dtype)
    vp_flat = pallas_linear(v.reshape(bs * S, d_model), params["v_linear_w"],
                            params["v_linear_b"], compute_dtype=compute_dtype)

    # Head-major layout for the per-(batch, head) attention grid.  This small transpose
    # (bs*S*d_model elements) is negligible vs. the bs*h*S^2 attention tensor traffic.
    def to_heads(x_flat):
        return (x_flat.reshape(bs, S, n_heads, d_k)
                .transpose(0, 2, 1, 3)
                .astype(compute_dtype))

    qp = to_heads(qk_proj[: bs * S])
    kp = to_heads(qk_proj[bs * S:])
    vp = to_heads(vp_flat)

    # Tiny shared precomputes: (S,S) position distance, per-head coeffs, mask bias.
    idx = jnp.arange(S, dtype=jnp.float32)
    pos = jnp.abs(idx[None, :] - idx[:, None]) / 21.0                    # (S, S) f32
    pos_coef = jax.nn.softplus(params["gammas"]).reshape(n_heads)        # (h,) f32, -> SMEM
    bias = jnp.where(mask == 0, jnp.float32(-1e32), jnp.float32(0.0))    # (S, S) f32
    # TODO(synk): per-batch masks (bs, 1, S, S) would need a batch-indexed bias BlockSpec.

    out_heads, att_weight = pallas_attention(qp, kp, vp, pos, bias, pos_coef, d_k)

    concat = out_heads.transpose(0, 2, 1, 3).reshape(bs * S, d_model)
    output = pallas_linear(concat, params["out_proj_w"], params["out_proj_b"],
                           compute_dtype=compute_dtype)
    return output.reshape(bs, S, d_model), att_weight


# ------------------------------ pure-JAX reference ----------------------------- #

def reference(q, k, v, mask, params, n_heads, d_k):
    bs, seqlen, d_model = q.shape

    def lin(x, w, b):
        return x @ w.T + b

    def proj(x, w, b):
        return lin(x, w, b).reshape(bs, seqlen, n_heads, d_k).transpose(0, 2, 1, 3)

    kp = proj(k, params["k_linear_w"], params["k_linear_b"])
    qp = proj(q, params["k_linear_w"], params["k_linear_b"])
    vp = proj(v, params["v_linear_w"], params["v_linear_b"])

    scores = jnp.einsum("bhqd,bhkd->bhqk", qp, kp) / math.sqrt(d_k)
    x1 = jnp.broadcast_to(jnp.arange(seqlen)[None, :], (seqlen, seqlen))
    x2 = x1.T
    pos = jnp.abs((x1 - x2).astype(jnp.float32) / 21.0)[None, None]
    gamma = (-1.0 * jax.nn.softplus(params["gammas"]))[None]             # (1, h, 1, 1)
    total = jnp.clip(jnp.exp(-pos * gamma), 1e-5, 1e5)
    scores = scores * total
    scores = jnp.where(mask[None, None] == 0, -1e32, scores)
    att = jax.nn.softmax(scores, axis=-1)
    out = jnp.einsum("bhqk,bhkd->bhqd", att, vp)
    concat = out.transpose(0, 2, 1, 3).reshape(bs, seqlen, d_model)
    output = lin(concat, params["out_proj_w"], params["out_proj_b"])
    return output, att


# ----------------------------------- params ------------------------------------ #

def init_params(key, d_model, n_heads):
    ks = jax.random.split(key, 4)
    bound = math.sqrt(6.0 / (d_model + d_model))             # xavier_uniform
    g_bound = math.sqrt(6.0 / (n_heads + 1))
    return {
        "k_linear_w": jax.random.uniform(ks[0], (d_model, d_model), jnp.float32, -bound, bound),
        "k_linear_b": jnp.zeros((d_model,), jnp.float32),
        "v_linear_w": jax.random.uniform(ks[1], (d_model, d_model), jnp.float32, -bound, bound),
        "v_linear_b": jnp.zeros((d_model,), jnp.float32),
        "out_proj_w": jax.random.uniform(ks[2], (d_model, d_model), jnp.float32, -bound, bound),
        "out_proj_b": jnp.zeros((d_model,), jnp.float32),
        "gammas": jax.random.uniform(ks[3], (n_heads, 1, 1), jnp.float32, -g_bound, g_bound),
    }


if __name__ == "__main__":
    bs, seqlen, d_model, n_heads = 2, 8, 32, 4
    d_k = d_model // n_heads

    root = jax.random.PRNGKey(0)
    kq, kk, kv, kparams = jax.random.split(root, 4)
    q = jax.random.normal(kq, (bs, seqlen, d_model), jnp.float32)
    k = jax.random.normal(kk, (bs, seqlen, d_model), jnp.float32)
    v = jax.random.normal(kv, (bs, seqlen, d_model), jnp.float32)
    mask = jnp.tril(jnp.ones((seqlen, seqlen), jnp.int32))    # 0 => masked position

    params = init_params(kparams, d_model, n_heads)
    ref_out, ref_att = reference(q, k, v, mask, params, n_heads, d_k)

    # f32 path: tight numerical check against the pure-JAX reference.
    out, att = multi_head_attention(q, k, v, mask, params, n_heads, d_k,
                                    compute_dtype=jnp.float32)
    jax.block_until_ready((out, att))
    assert jnp.allclose(out, ref_out, atol=1e-4, rtol=1e-4), "f32 output mismatch"
    assert jnp.allclose(att, ref_att, atol=2e-5, rtol=1e-4), "f32 attention-weight mismatch"

    # bf16 matmul path (MXU-native, f32 accumulation): looser tolerance vs f32 reference.
    out_bf, att_bf = multi_head_attention(q, k, v, mask, params, n_heads, d_k,
                                          compute_dtype=jnp.bfloat16)
    jax.block_until_ready((out_bf, att_bf))
    assert jnp.allclose(out_bf, ref_out, atol=1e-1, rtol=1e-1), "bf16 output mismatch"
    assert jnp.allclose(att_bf, ref_att, atol=3e-2, rtol=3e-2), "bf16 attention-weight mismatch"

    print("KERNEL_OK")
</pallas_src>

<mosaic_0001>
module attributes {stable_mosaic.version = 11 : i64} {
  func.func @_linear_kernel(%arg0: i32, %arg1: i32, %arg2: i32, %arg3: memref<32x128xf32, #tpu.memory_space<vmem>>, %arg4: memref<128x128xf32, #tpu.memory_space<vmem>>, %arg5: memref<1x128xf32, #tpu.memory_space<vmem>>, %arg6: memref<32x128xf32, #tpu.memory_space<vmem>>, %arg7: memref<32x128xf32, #tpu.memory_space<vmem>>) attributes {dimension_semantics = [#tpu.dimension_semantics<parallel>, #tpu.dimension_semantics<parallel>, #tpu.dimension_semantics<arbitrary>], iteration_bounds = array<i64: 1, 1, 1>, scalar_prefetch = 0 : i64, scratch_operands = 1 : i64, tpu.core_type = #tpu.core_type<tc>, window_params = [{transform_indices = @transform_0, window_bounds = array<i64: 32, 128>}, {transform_indices = @transform_1, window_bounds = array<i64: 128, 128>}, {transform_indices = @transform_2, window_bounds = array<i64: 1, 128>}, {transform_indices = @transform_3, window_bounds = array<i64: 32, 128>}]} {
    %c0_i32 = arith.constant 0 : i32
    %0 = arith.cmpi eq, %arg2, %c0_i32 : i32
    %1 = arith.extui %0 : i1 to i32
    %c0_i32_0 = arith.constant 0 : i32
    %2 = arith.cmpi ne, %1, %c0_i32_0 : i32
    scf.if %2 {
      %cst_10 = arith.constant 0.000000e+00 : f32
      %12 = vector.broadcast %cst_10 : f32 to vector<32x128xf32>
      %c0_11 = arith.constant 0 : index
      %c0_12 = arith.constant 0 : index
      %13 = vector.load %arg7[%c0_11, %c0_12] : memref<32x128xf32, #tpu.memory_space<vmem>>, vector<32x128xf32>
      tpu.vector_store %arg7[%c0_11, %c0_12], %12 {strides = array<i32>} : memref<32x128xf32, #tpu.memory_space<vmem>>, vector<32x128xf32>,
    } else {
    }
    %c0 = arith.constant 0 : index
    %c0_1 = arith.constant 0 : index
    %3 = vector.load %arg7[%c0, %c0_1] : memref<32x128xf32, #tpu.memory_space<vmem>>, vector<32x128xf32>
    %c0_2 = arith.constant 0 : index
    %c0_3 = arith.constant 0 : index
    %4 = vector.load %arg3[%c0_2, %c0_3] : memref<32x128xf32, #tpu.memory_space<vmem>>, vector<32x128xf32>
    %c0_4 = arith.constant 0 : index
    %c0_5 = arith.constant 0 : index
    %5 = vector.load %arg4[%c0_4, %c0_5] : memref<128x128xf32, #tpu.memory_space<vmem>>, vector<128x128xf32>
    %cst = arith.constant dense<0.000000e+00> : vector<32x128xf32>
    %6 = tpu.matmul %4, %5, %cst {dimension_numbers = #tpu.dot_dimension_numbers<[1], [1], [0], [0], [0, 0, 1, 0], [], []>} : vector<32x128xf32>, vector<128x128xf32>, vector<32x128xf32> -> vector<32x128xf32>
    %7 = arith.addf %3, %6 : vector<32x128xf32>
    %c0_6 = arith.constant 0 : index
    %c0_7 = arith.constant 0 : index
    %8 = vector.load %arg7[%c0_6, %c0_7] : memref<32x128xf32, #tpu.memory_space<vmem>>, vector<32x128xf32>
    tpu.vector_store %arg7[%c0_6, %c0_7], %7 {strides = array<i32>} : memref<32x128xf32, #tpu.memory_space<vmem>>, vector<32x128xf32>,
    %c0_i32_8 = arith.constant 0 : i32
    %9 = arith.cmpi eq, %arg2, %c0_i32_8 : i32
    %10 = arith.extui %9 : i1 to i32
    %c0_i32_9 = arith.constant 0 : i32
    %11 = arith.cmpi ne, %10, %c0_i32_9 : i32
    scf.if %11 {
      %c0_10 = arith.constant 0 : index
      %c0_11 = arith.constant 0 : index
      %12 = vector.load %arg7[%c0_10, %c0_11] : memref<32x128xf32, #tpu.memory_space<vmem>>, vector<32x128xf32>
      %c0_12 = arith.constant 0 : index
      %c0_13 = arith.constant 0 : index
      %13 = vector.load %arg5[%c0_12, %c0_13] : memref<1x128xf32, #tpu.memory_space<vmem>>, vector<1x128xf32>
      %14 = vector.broadcast %13 : vector<1x128xf32> to vector<32x128xf32>
      %15 = arith.addf %12, %14 : vector<32x128xf32>
      %c0_14 = arith.constant 0 : index
      %c0_15 = arith.constant 0 : index
      %16 = vector.load %arg6[%c0_14, %c0_15] : memref<32x128xf32, #tpu.memory_space<vmem>>, vector<32x128xf32>
      tpu.vector_store %arg6[%c0_14, %c0_15], %15 {strides = array<i32>} : memref<32x128xf32, #tpu.memory_space<vmem>>, vector<32x128xf32>,
    } else {
    }
    return
  }
  func.func @transform_0(%arg0: i32, %arg1: i32, %arg2: i32) -> (i32, i32) {
    %c0_i32 = arith.constant 0 : i32
    return %arg0, %arg2 : i32, i32
  }
  func.func @transform_1(%arg0: i32, %arg1: i32, %arg2: i32) -> (i32, i32) {
    %c0_i32 = arith.constant 0 : i32
    return %arg1, %arg2 : i32, i32
  }
  func.func @transform_2(%arg0: i32, %arg1: i32, %arg2: i32) -> (i32, i32) {
    %c0_i32 = arith.constant 0 : i32
    %c0_i32_0 = arith.constant 0 : i32
    return %c0_i32, %arg1 : i32, i32
  }
  func.func @transform_3(%arg0: i32, %arg1: i32, %arg2: i32) -> (i32, i32) {
    %c0_i32 = arith.constant 0 : i32
    return %arg0, %arg1 : i32, i32
  }
}

</mosaic_0001>

<llo_original>
// kernel: tpu_custom_call.1
$region0: #{tpu_custom_call.1}
  #allocation0 [shape = 'u32[]', space=smem, size = 0x4, offset = 0x4, fixed_abs, tag = 'smem constant byte address 0x4 - core index']
  #allocation1 [shape = 'u32[72,128]{1,0:T(1,128)}', space=vmem, size = 0x9000, scoped, tag = 'internal scratch']
  #allocation2 [shape = 'f32[32,128]{1,0:T(8,128)}', space=vmem, size = 0x4000, scoped, tag = 'scratch operand']
  %s0 = inlined_call_operand.hbm [shape: f32[32,128], index: 0, kind: input, shape index: {}]
  %s1 = inlined_call_operand.hbm [shape: f32[128,128], index: 1, kind: input, shape index: {}]
  %s2 = inlined_call_operand.vmem [shape: f32[1,128], index: 2, kind: input, shape index: {}]
  %s3 = inlined_call_operand.hbm [shape: f32[32,128], index: 3, kind: output, shape index: {}]
  %s4 = sld [smem:[#allocation0]]
  $region38: #{tpu_custom_call.1} parent=0
    _
  %s6 = ssub.s32 1, %s4
  %s7 = scalar_select 0, %s6, %s4
  $region1: #{tpu_custom_call.1} parent=0
    #allocation3 [shape = 'u8[16384]{0}', space=vmem, size = 0x4000, scoped, tag = 'input window, operand 0, single buffered']
    #allocation4 [shape = 's32[1]{0}', space=sflag, size = 0x4, scoped, tag = 'scoped memory for tpu_custom_call.1']
    #allocation5 [shape = 's32[1]{0}', space=sflag, size = 0x4, scoped, tag = 'scoped memory for tpu_custom_call.1']
    #allocation6 [shape = 'u8[65536]{0}', space=vmem, size = 0x10000, scoped, tag = 'input window, operand 1, single buffered']
    #allocation7 [shape = 's32[1]{0}', space=sflag, size = 0x4, scoped, tag = 'scoped memory for tpu_custom_call.1']
    #allocation8 [shape = 'u8[16384]{0}', space=vmem, size = 0x4000, scoped, tag = 'output window, operand 0, single buffered']
    %8 = vsyncpa [#allocation4], 0
    %9 = vsyncpa [#allocation7], 0
    %10 = vsyncpa [#allocation5], 0
    // Predicated region
    $region2: #{tpu_custom_call.1} parent=1 // pred_check
      _
    $region3: #{tpu_custom_call.1} parent=1 // pred_check_branch
      %12 = sbr.rel (0) target = $region5
    $region4: #{tpu_custom_call.1} parent=1 // pred_region
      %14 = vsyncadd [#allocation4], 0
      %s15 = sshll.u32 %s0, 4
      %s16 = int_to_ptr.hbm [resolvable:$true] %s15
      %s17 = sshll.u32 [#allocation3], 4
      %s18 = int_to_ptr.vmem [resolvable:$true] %s17
      %23 = dma.hbm_to_vmem [thread:$0]  %s16, 512, %s18, [#allocation4], 128, 128, 8
    $region5: #{tpu_custom_call.1} parent=1 // pred_fallthru
      _
    // Predicated region
    $region6: #{tpu_custom_call.1} parent=1 // pred_check
      _
    $region7: #{tpu_custom_call.1} parent=1 // pred_check_branch
      %25 = sbr.rel (0) target = $region9
    $region8: #{tpu_custom_call.1} parent=1 // pred_region
      %27 = vsyncadd [#allocation7], 0
      %s28 = sshll.u32 %s1, 4
      %s29 = int_to_ptr.hbm [resolvable:$true] %s28
      %s30 = sshll.u32 [#allocation6], 4
      %s31 = int_to_ptr.vmem [resolvable:$true] %s30
      %36 = dma.hbm_to_vmem [thread:$0]  %s29, 2048, %s31, [#allocation7], 128, 128, 8
    $region9: #{tpu_custom_call.1} parent=1 // pred_fallthru
      _
    // Predicated region
    $region10: #{tpu_custom_call.1} parent=1 // pred_check
      _
    $region11: #{tpu_custom_call.1} parent=1 // pred_check_branch
      %38 = sbr.rel (0) target = $region13
    $region12: #{tpu_custom_call.1} parent=1 // pred_region
      _
    $region13: #{tpu_custom_call.1} parent=1 // pred_fallthru
      _
    // Predicated region
    $region14: #{tpu_custom_call.1} parent=1 // pred_check
      _
    $region15: #{tpu_custom_call.1} parent=1 // pred_check_branch
      %40 = sbr.rel (0) target = $region17
    $region16: #{tpu_custom_call.1} parent=1 // pred_region
      %42 = dma.done [#allocation4], 512
    $region17: #{tpu_custom_call.1} parent=1 // pred_fallthru
      _
    // Predicated region
    $region18: #{tpu_custom_call.1} parent=1 // pred_check
      _
    $region19: #{tpu_custom_call.1} parent=1 // pred_check_branch
      %44 = sbr.rel (0) target = $region21
    $region20: #{tpu_custom_call.1} parent=1 // pred_region
      %46 = dma.done [#allocation7], 2048
    $region21: #{tpu_custom_call.1} parent=1 // pred_fallthru
      _
    %p47 = scmp.eq.s32.totalorder 0, 0
    // Predicated region
    $region22: #{tpu_custom_call.1} parent=1 // pred_check
      %p48 = pneg %p47
    $region23: #{tpu_custom_call.1} parent=1 // pred_check_branch
      %50 = sbr.rel (%p48) target = $region25
    $region24: #{tpu_custom_call.1} parent=1 // pred_region
      %51 = vst [vmem:[#allocation2] sm:$0xff] 0.0
      %52 = vst [vmem:[#allocation2 + $0x8] sm:$0xff] 0.0
      %53 = vst [vmem:[#allocation2 + $0x10] sm:$0xff] 0.0
      %54 = vst [vmem:[#allocation2 + $0x18] sm:$0xff] 0.0
    $region25: #{tpu_custom_call.1} parent=1 // pred_fallthru
      _
    %v55 = vld [vmem:[#allocation2] sm:$0xff]
    %v56 = vld [vmem:[#allocation2 + $0x8] sm:$0xff]
    %v57 = vld [vmem:[#allocation2 + $0x10] sm:$0xff]
    %v58 = vld [vmem:[#allocation2 + $0x18] sm:$0xff]
    %v59 = vld [vmem:[#allocation3] sm:$0xff]
    %v60 = vld [vmem:[#allocation3 + $0x8] sm:$0xff]
    %v61 = vld [vmem:[#allocation3 + $0x10] sm:$0xff]
    %v62 = vld [vmem:[#allocation3 + $0x18] sm:$0xff]
    %v63 = vld [vmem:[#allocation6] sm:$0xff]
    %v64 = vld [vmem:[#allocation6 + $0x8] sm:$0xff]
    %v65 = vld [vmem:[#allocation6 + $0x10] sm:$0xff]
    %v66 = vld [vmem:[#allocation6 + $0x18] sm:$0xff]
    %v67 = vld [vmem:[#allocation6 + $0x20] sm:$0xff]
    %v68 = vld [vmem:[#allocation6 + $0x28] sm:$0xff]
    %v69 = vld [vmem:[#allocation6 + $0x30] sm:$0xff]
    %v70 = vld [vmem:[#allocation6 + $0x38] sm:$0xff]
    %v71 = vld [vmem:[#allocation6 + $0x40] sm:$0xff]
    %v72 = vld [vmem:[#allocation6 + $0x48] sm:$0xff]
    %v73 = vld [vmem:[#allocation6 + $0x50] sm:$0xff]
    %v74 = vld [vmem:[#allocation6 + $0x58] sm:$0xff]
    %v75 = vld [vmem:[#allocation6 + $0x60] sm:$0xff]
    %v76 = vld [vmem:[#allocation6 + $0x68] sm:$0xff]
    %v77 = vld [vmem:[#allocation6 + $0x70] sm:$0xff]
    %v78 = vld [vmem:[#allocation6 + $0x78] sm:$0xff]
    %79 = vmatpush.xpose.msra.mxu0 %v78
    %80 = vmatpush.xpose.msra.mxu0 %v77
    %81 = vmatpush.xpose.msra.mxu0 %v76
    %82 = vmatpush.xpose.msra.mxu0 %v75
    %83 = vmatpush.xpose.msra.mxu0 %v74
    %84 = vmatpush.xpose.msra.mxu0 %v73
    %85 = vmatpush.xpose.msra.mxu0 %v72
    %86 = vmatpush.xpose.msra.mxu0 %v71
    %87 = vmatpush.xpose.msra.mxu0 %v70
    %88 = vmatpush.xpose.msra.mxu0 %v69
    %89 = vmatpush.xpose.msra.mxu0 %v68
    %90 = vmatpush.xpose.msra.mxu0 %v67
    %91 = vmatpush.xpose.msra.mxu0 %v66
    %92 = vmatpush.xpose.msra.mxu0 %v65
    %93 = vmatpush.xpose.msra.mxu0 %v64
    %94 = vmatpush.xpose.msra.mxu0 %v63
    %95 = vmatmul.f32.gmra.mxu0 %v59
    %v96 = vpop.f32.mrf.mxu0
    %v97 = vadd.f32 0.0, %v96
    %98 = vmatmul.f32.gmra.mxu0 %v60
    %v99 = vpop.f32.mrf.mxu0
    %v100 = vadd.f32 0.0, %v99
    %101 = vmatmul.f32.gmra.mxu0 %v61
    %v102 = vpop.f32.mrf.mxu0
    %v103 = vadd.f32 0.0, %v102
    %104 = vmatmul.f32.gmra.mxu0 %v62
    %v105 = vpop.f32.mrf.mxu0
    %v106 = vadd.f32 0.0, %v105
    %107 = vdwg.mxu0
    %v108 = vadd.f32 %v55, %v97
    %v109 = vadd.f32 %v56, %v100
    %v110 = vadd.f32 %v57, %v103
    %v111 = vadd.f32 %v58, %v106
    %112 = vst [vmem:[#allocation2] sm:$0xff] %v108
    %113 = vst [vmem:[#allocation2 + $0x8] sm:$0xff] %v109
    %114 = vst [vmem:[#allocation2 + $0x10] sm:$0xff] %v110
    %115 = vst [vmem:[#allocation2 + $0x18] sm:$0xff] %v111
    // Predicated region
    $region26: #{tpu_custom_call.1} parent=1 // pred_check
      %p116 = pneg %p47
    $region27: #{tpu_custom_call.1} parent=1 // pred_check_branch
      %118 = sbr.rel (%p116) target = $region29
    $region28: #{tpu_custom_call.1} parent=1 // pred_region
      %v119 = vld [vmem:[#allocation2] sm:$0xff]
      %v120 = vld [vmem:[#allocation2 + $0x8] sm:$0xff]
      %v121 = vld [vmem:[#allocation2 + $0x10] sm:$0xff]
      %v122 = vld [vmem:[#allocation2 + $0x18] sm:$0xff]
      %v123 = vld [vmem:[%s2] sm:$0x1]
      %v125 = vperm.slane %v123, 0
      %v127 = vadd.f32 %v119, %v125
      %v128 = vadd.f32 %v120, %v125
      %v129 = vadd.f32 %v121, %v125
      %v130 = vadd.f32 %v122, %v125
      %131 = vst [vmem:[#allocation8] sm:$0xff] %v127
      %132 = vst [vmem:[#allocation8 + $0x8] sm:$0xff] %v128
      %133 = vst [vmem:[#allocation8 + $0x10] sm:$0xff] %v129
      %134 = vst [vmem:[#allocation8 + $0x18] sm:$0xff] %v130
    $region29: #{tpu_custom_call.1} parent=1 // pred_fallthru
      _
    // Predicated region
    $region30: #{tpu_custom_call.1} parent=1 // pred_check
      _
    $region31: #{tpu_custom_call.1} parent=1 // pred_check_branch
      %136 = sbr.rel (0) target = $region33
    $region32: #{tpu_custom_call.1} parent=1 // pred_region
      %138 = vsyncadd [#allocation5], 0
      %s139 = sshll.u32 [#allocation8], 4
      %s140 = int_to_ptr.vmem [resolvable:$true] %s139
      %s141 = sshll.u32 %s3, 4
      %s142 = int_to_ptr.hbm [resolvable:$true] %s141
      %147 = dma.vmem_to_hbm [thread:$0]  %s140, 512, %s142, [#allocation5], 128, 128, 8
    $region33: #{tpu_custom_call.1} parent=1 // pred_fallthru
      _
    // Predicated region
    $region34: #{tpu_custom_call.1} parent=1 // pred_check
      _
    $region35: #{tpu_custom_call.1} parent=1 // pred_check_branch
      %149 = sbr.rel (0) target = $region37
    $region36: #{tpu_custom_call.1} parent=1 // pred_region
      %151 = dma.done [#allocation5], 512
    $region37: #{tpu_custom_call.1} parent=1 // pred_fallthru
      _
    %152 = vsyncpa [#allocation4], 1
    %153 = vsyncpa [#allocation7], 1
    %154 = vsyncpa [#allocation5], 1

</llo_original>
